<compile_context>
chip_gen: v7x
topology: tpu7x:2x2x1
jax: 0.10.0
libtpu: 0.0.40
codegen_flags: <defaults>
</compile_context>

<pallas_src>
import functools
import math

import jax
import jax.numpy as jnp
from jax import lax
from jax.experimental import pallas as pl
from jax.experimental.pallas import tpu as pltpu

# --- module constants (from FourierLoss.__init__ defaults) ---
R_COEF, G_COEF, B_COEF = 0.299, 0.587, 0.114
LOSS_SUM_COEFFS = (1.0, 1.0)        # loss_sum_coeffs
FOUR_NORMALIZED = True              # normalized rfft -> divide by sqrt(H*W)
K_DROP = 1.0 / 225.0                # drop_fft_center default k (self.k unused in forward)


def _fourier_loss_kernel(yp_ref, yt_ref, cwsw_hbm, chsh_hbm, out_ref,
                         basis_w, basis_h, acc_ref, dma_sem,
                         *, B, H, W, WC, WCP, N, kh_drop, kw_drop, norm):
    s = pl.program_id(1)

    @pl.when(s == 0)
    def _init():
        # Single-buffered, one-shot DMA of the constant DFT bases into
        # persistent VMEM scratch (avoids double-buffering them every step).
        cp_w = pltpu.make_async_copy(cwsw_hbm, basis_w, dma_sem.at[0])
        cp_h = pltpu.make_async_copy(chsh_hbm, basis_h, dma_sem.at[1])
        cp_w.start()
        cp_h.start()
        cp_w.wait()
        cp_h.wait()
        acc_ref[...] = jnp.zeros_like(acc_ref)

    # ---- pixel-space MSE partial sum + rgb->gray (stacked pred|true rows) ----
    sum_pix = jnp.float32(0.0)
    gray_rows_p = []
    gray_rows_t = []
    for b in range(B):                       # B is small & static -> unrolled
        yp = yp_ref[b].astype(jnp.float32)   # (3, H, W)
        yt = yt_ref[b].astype(jnp.float32)
        d = yp - yt
        sum_pix = sum_pix + jnp.sum(d * d)
        gray_rows_p.append(R_COEF * yp[0] + G_COEF * yp[1] + B_COEF * yp[2])
        gray_rows_t.append(R_COEF * yt[0] + G_COEF * yt[1] + B_COEF * yt[2])
    g_all = jnp.concatenate(gray_rows_p + gray_rows_t, axis=0)   # (2*B*H, W)

    # ---- W-DFT: one fused MXU matmul -> [re | im] for all pred+true images ----
    # basis_w = [cos(2*pi*w*k/W) | -sin(2*pi*w*k/W)], zero in padded columns.
    re_im = jnp.dot(g_all, basis_w[...],
                    preferred_element_type=jnp.float32)          # (2*B*H, 2*WCP)

    ch = basis_h[0]   # (H, H) cos
    sh = basis_h[1]   # (H, H) sin

    def drop_center(x):
        # Faithful to drop_fft_center (incl. the pytorch `-0:` full-range quirk).
        if kw_drop == 0:
            return x
        row = lax.broadcasted_iota(jnp.int32, x.shape, 0)
        col = lax.broadcasted_iota(jnp.int32, x.shape, 1)
        top = row < kh_drop
        bottom = (row >= 0) if kh_drop == 0 else (row >= (H - kh_drop))
        mask = jnp.logical_and(jnp.logical_or(top, bottom), col < kw_drop)
        return jnp.where(mask, jnp.zeros_like(x), x)

    # ---- H-DFT: two fused matmuls per image over [re_p | im_p | re_t | im_t] ----
    sum_four = jnp.float32(0.0)
    for b in range(B):
        xp = re_im[b * H:(b + 1) * H, :]               # (H, 2*WCP)  pred re|im
        xt = re_im[(B + b) * H:(B + b + 1) * H, :]     # (H, 2*WCP)  true re|im
        x = jnp.concatenate([xp, xt], axis=1)          # (H, 4*WCP)
        a_c = jnp.dot(ch, x, preferred_element_type=jnp.float32)
        a_s = jnp.dot(sh, x, preferred_element_type=jnp.float32)
        # Y_re = ch@re + sh@im ; Y_im = ch@im - sh@re   (pred half, true half)
        yre_p = a_c[:, 0 * WCP:1 * WCP] + a_s[:, 1 * WCP:2 * WCP]
        yim_p = a_c[:, 1 * WCP:2 * WCP] - a_s[:, 0 * WCP:1 * WCP]
        yre_t = a_c[:, 2 * WCP:3 * WCP] + a_s[:, 3 * WCP:4 * WCP]
        yim_t = a_c[:, 3 * WCP:4 * WCP] - a_s[:, 2 * WCP:3 * WCP]
        abs_p = jnp.sqrt(yre_p * yre_p + yim_p * yim_p) * norm
        abs_t = jnp.sqrt(yre_t * yre_t + yim_t * yim_t) * norm
        # Mask is identical for pred and true -> apply once to the difference.
        dfour = drop_center(abs_p - abs_t)
        sum_four = sum_four + jnp.sum(dfour * dfour)

    pix_count = jnp.float32(N * 3 * H * W)
    four_count = jnp.float32(N * H * WC)      # true WC; padded cols are exact zeros
    contrib = (LOSS_SUM_COEFFS[0] * sum_pix / pix_count
               + LOSS_SUM_COEFFS[1] * sum_four / four_count)
    acc_ref[...] = acc_ref[...] + contrib

    @pl.when(s == pl.num_programs(1) - 1)
    def _finalize():
        out_ref[0] = acc_ref[...]


def _pick_batch_block(nb, H, W):
    # Largest divisor of nb whose double-buffered input blocks stay well within
    # the default scoped VMEM limit (2 inputs x 2 buffers x B*3*H*W*4 bytes),
    # leaving room for the DFT bases and frequency-domain intermediates.
    budget = 8 * 1024 * 1024
    per_image = 2 * 2 * 3 * H * W * 4
    best = 1
    for cand in range(1, nb + 1):
        if nb % cand == 0 and cand * per_image <= budget:
            best = cand
    return best


def fourier_loss(y_pred, y_true):
    N, C, H, W = y_pred.shape
    assert C == 3, "FourierLoss expects RGB inputs (N, 3, H, W)"
    WC = W // 2 + 1
    WCP = ((WC + 127) // 128) * 128           # lane-dense padded frequency axis

    # Split the batch across TensorCores (v7x megacore; harmless on 1-TC chips).
    n_cores = 2 if (N % 2 == 0 and N >= 2) else 1
    nb = N // n_cores
    B = _pick_batch_block(nb, H, W)           # images per grid step
    n_steps = nb // B

    # DFT bases (glue, plain JAX).  Columns >= WC are zeroed so padded frequency
    # columns contribute exactly zero; sin is pre-negated so the fused W-DFT
    # matmul yields [re | im] directly.
    w_idx = jnp.arange(W, dtype=jnp.float32)[:, None]
    kw_idx = jnp.arange(WCP, dtype=jnp.float32)[None, :]
    ang_w = 2.0 * jnp.pi * w_idx * kw_idx / W
    valid = (jnp.arange(WCP) < WC)[None, :]
    cwsw = jnp.concatenate(
        [jnp.where(valid, jnp.cos(ang_w), 0.0),
         jnp.where(valid, -jnp.sin(ang_w), 0.0)], axis=1)          # (W, 2*WCP)

    h_idx = jnp.arange(H, dtype=jnp.float32)
    ang_h = 2.0 * jnp.pi * h_idx[:, None] * h_idx[None, :] / H
    chsh = jnp.stack([jnp.cos(ang_h), jnp.sin(ang_h)], axis=0)     # (2, H, H)

    norm = (1.0 / math.sqrt(H * W)) if FOUR_NORMALIZED else 1.0
    kh_drop = int(H * K_DROP)
    kw_drop = int(WC * K_DROP)

    kernel = functools.partial(
        _fourier_loss_kernel,
        B=B, H=H, W=W, WC=WC, WCP=WCP, N=N,
        kh_drop=kh_drop, kw_drop=kw_drop, norm=norm)

    out = pl.pallas_call(
        kernel,
        out_shape=jax.ShapeDtypeStruct((n_cores, 1, 1), jnp.float32),
        grid_spec=pltpu.PrefetchScalarGridSpec(
            num_scalar_prefetch=0,
            grid=(n_cores, n_steps),
            in_specs=[
                pl.BlockSpec((B, 3, H, W),
                             lambda c, s: (c * n_steps + s, 0, 0, 0)),   # y_pred
                pl.BlockSpec((B, 3, H, W),
                             lambda c, s: (c * n_steps + s, 0, 0, 0)),   # y_true
                pl.BlockSpec(memory_space=pl.ANY),    # W-DFT basis (copied once/core)
                pl.BlockSpec(memory_space=pl.ANY),    # H-DFT basis (copied once/core)
            ],
            out_specs=pl.BlockSpec((1, 1, 1), lambda c, s: (c, 0, 0)),
            scratch_shapes=[
                pltpu.VMEM((W, 2 * WCP), jnp.float32),   # [cos | -sin] W basis
                pltpu.VMEM((2, H, H), jnp.float32),      # [cos, sin]   H basis
                pltpu.VMEM((1, 1), jnp.float32),         # per-core loss accumulator
                pltpu.SemaphoreType.DMA((2,)),
            ],
        ),
        compiler_params=pltpu.CompilerParams(
            dimension_semantics=("parallel", "arbitrary"),
        ),
    )(y_pred, y_true, cwsw, chsh)
    return jnp.sum(out)


# ---------------- pure-JAX reference (for a silent sanity check) ----------------
def _drop_fft_center_ref(x, k=K_DROP):
    h, wc = x.shape[1], x.shape[2]
    kh, kw = int(h * k), int(wc * k)
    if kw == 0:
        return x
    row = jnp.arange(h)[:, None]
    col = jnp.arange(wc)[None, :]
    top = row < kh
    bottom = (row >= 0) if kh == 0 else (row >= h - kh)
    mask = (jnp.logical_or(top, bottom) & (col < kw))[None, :, :]
    return jnp.where(mask, 0.0, x)


def fourier_loss_reference(y_pred, y_true):
    gp = R_COEF * y_pred[:, 0] + G_COEF * y_pred[:, 1] + B_COEF * y_pred[:, 2]
    gt = R_COEF * y_true[:, 0] + G_COEF * y_true[:, 1] + B_COEF * y_true[:, 2]
    fft_norm = "ortho" if FOUR_NORMALIZED else "backward"
    ap = _drop_fft_center_ref(jnp.abs(jnp.fft.rfft2(gp, norm=fft_norm)))
    at = _drop_fft_center_ref(jnp.abs(jnp.fft.rfft2(gt, norm=fft_norm)))
    mse_pix = jnp.mean((y_pred - y_true) ** 2)
    mse_four = jnp.mean((ap - at) ** 2)
    return LOSS_SUM_COEFFS[0] * mse_pix + LOSS_SUM_COEFFS[1] * mse_four


if __name__ == "__main__":
    key = jax.random.PRNGKey(0)
    kp, kt = jax.random.split(key)
    N, C, H, W = 2, 3, 16, 16
    y_pred = jax.random.uniform(kp, (N, C, H, W), dtype=jnp.float32)
    y_true = jax.random.uniform(kt, (N, C, H, W), dtype=jnp.float32)

    loss = fourier_loss(y_pred, y_true)
    jax.block_until_ready(loss)

    ref = fourier_loss_reference(y_pred, y_true)
    jax.block_until_ready(ref)
    err = abs(float(loss) - float(ref))
    assert err <= 5e-3 * max(1.0, abs(float(ref))), (float(loss), float(ref))

    print("KERNEL_OK")
</pallas_src>

<mosaic_0001>
module attributes {stable_mosaic.version = 11 : i64} {
  func.func @_fourier_loss_kernel(%arg0: i32, %arg1: i32, %arg2: memref<1x3x16x16xf32, #tpu.memory_space<vmem>>, %arg3: memref<1x3x16x16xf32, #tpu.memory_space<vmem>>, %arg4: memref<16x256xf32, #tpu.memory_space<any>>, %arg5: memref<2x16x16xf32, #tpu.memory_space<any>>, %arg6: memref<1x1x1xf32, #tpu.memory_space<vmem>>, %arg7: memref<16x256xf32, #tpu.memory_space<vmem>>, %arg8: memref<2x16x16xf32, #tpu.memory_space<vmem>>, %arg9: memref<1x1xf32, #tpu.memory_space<vmem>>, %arg10: memref<2x!tpu.dma_semaphore, #tpu.memory_space<semaphore_mem>>) attributes {dimension_semantics = [#tpu.dimension_semantics<parallel>, #tpu.dimension_semantics<arbitrary>], iteration_bounds = array<i64: 2, 1>, scalar_prefetch = 0 : i64, scratch_operands = 4 : i64, tpu.core_type = #tpu.core_type<tc>, window_params = [{transform_indices = @transform_0, window_bounds = array<i64: 1, 3, 16, 16>}, {transform_indices = @transform_1, window_bounds = array<i64: 1, 3, 16, 16>}, {}, {}, {transform_indices = @transform_4, window_bounds = array<i64: 1, 1, 1>}]} {
    %c0_i32 = arith.constant 0 : i32
    %0 = arith.cmpi eq, %arg1, %c0_i32 : i32
    %1 = arith.extui %0 : i1 to i32
    %c0_i32_0 = arith.constant 0 : i32
    %2 = arith.cmpi ne, %1, %c0_i32_0 : i32
    scf.if %2 {
      %c0_i32_39 = arith.constant 0 : i32
      %97 = tpu.memref_slice %arg10[%c0_i32_39] : memref<2x!tpu.dma_semaphore, #tpu.memory_space<semaphore_mem>> -> memref<1x!tpu.dma_semaphore, #tpu.memory_space<semaphore_mem>>
      %98 = tpu.memref_squeeze %97 : memref<1x!tpu.dma_semaphore, #tpu.memory_space<semaphore_mem>> -> memref<!tpu.dma_semaphore, #tpu.memory_space<semaphore_mem>>
      tpu.enqueue_dma source(%arg4 : memref<16x256xf32, #tpu.memory_space<any>>) target(%arg7 : memref<16x256xf32, #tpu.memory_space<vmem>>) target_semaphore(%98 : memref<!tpu.dma_semaphore, #tpu.memory_space<semaphore_mem>>)
      %c1_i32 = arith.constant 1 : i32
      %99 = tpu.memref_slice %arg10[%c1_i32] : memref<2x!tpu.dma_semaphore, #tpu.memory_space<semaphore_mem>> -> memref<1x!tpu.dma_semaphore, #tpu.memory_space<semaphore_mem>>
      %100 = tpu.memref_squeeze %99 : memref<1x!tpu.dma_semaphore, #tpu.memory_space<semaphore_mem>> -> memref<!tpu.dma_semaphore, #tpu.memory_space<semaphore_mem>>
      tpu.enqueue_dma source(%arg5 : memref<2x16x16xf32, #tpu.memory_space<any>>) target(%arg8 : memref<2x16x16xf32, #tpu.memory_space<vmem>>) target_semaphore(%100 : memref<!tpu.dma_semaphore, #tpu.memory_space<semaphore_mem>>)
      %c0_i32_40 = arith.constant 0 : i32
      %101 = tpu.memref_slice %arg10[%c0_i32_40] : memref<2x!tpu.dma_semaphore, #tpu.memory_space<semaphore_mem>> -> memref<1x!tpu.dma_semaphore, #tpu.memory_space<semaphore_mem>>
      %102 = tpu.memref_squeeze %101 : memref<1x!tpu.dma_semaphore, #tpu.memory_space<semaphore_mem>> -> memref<!tpu.dma_semaphore, #tpu.memory_space<semaphore_mem>>
      tpu.wait_dma2 semaphore(%102 : memref<!tpu.dma_semaphore, #tpu.memory_space<semaphore_mem>>) src(%arg4 : memref<16x256xf32, #tpu.memory_space<any>>) dst(%arg7 : memref<16x256xf32, #tpu.memory_space<vmem>>)
      %c1_i32_41 = arith.constant 1 : i32
      %103 = tpu.memref_slice %arg10[%c1_i32_41] : memref<2x!tpu.dma_semaphore, #tpu.memory_space<semaphore_mem>> -> memref<1x!tpu.dma_semaphore, #tpu.memory_space<semaphore_mem>>
      %104 = tpu.memref_squeeze %103 : memref<1x!tpu.dma_semaphore, #tpu.memory_space<semaphore_mem>> -> memref<!tpu.dma_semaphore, #tpu.memory_space<semaphore_mem>>
      tpu.wait_dma2 semaphore(%104 : memref<!tpu.dma_semaphore, #tpu.memory_space<semaphore_mem>>) src(%arg5 : memref<2x16x16xf32, #tpu.memory_space<any>>) dst(%arg8 : memref<2x16x16xf32, #tpu.memory_space<vmem>>)
      %cst_42 = arith.constant 0.000000e+00 : f32
      %105 = vector.broadcast %cst_42 : f32 to vector<1x1xf32>
      %c0_43 = arith.constant 0 : index
      %c0_44 = arith.constant 0 : index
      %106 = vector.load %arg9[%c0_43, %c0_44] : memref<1x1xf32, #tpu.memory_space<vmem>>, vector<1x1xf32>
      tpu.vector_store %arg9[%c0_43, %c0_44], %105 {strides = array<i32>} : memref<1x1xf32, #tpu.memory_space<vmem>>, vector<1x1xf32>,
    } else {
    }
    %c0 = arith.constant 0 : index
    %c0_1 = arith.constant 0 : index
    %c0_2 = arith.constant 0 : index
    %c0_3 = arith.constant 0 : index
    %3 = vector.load %arg2[%c0, %c0_1, %c0_2, %c0_3] : memref<1x3x16x16xf32, #tpu.memory_space<vmem>>, vector<1x3x16x16xf32>
    %4 = vector.shape_cast %3 : vector<1x3x16x16xf32> to vector<3x16x16xf32>
    %c0_4 = arith.constant 0 : index
    %c0_5 = arith.constant 0 : index
    %c0_6 = arith.constant 0 : index
    %c0_7 = arith.constant 0 : index
    %5 = vector.load %arg3[%c0_4, %c0_5, %c0_6, %c0_7] : memref<1x3x16x16xf32, #tpu.memory_space<vmem>>, vector<1x3x16x16xf32>
    %6 = vector.shape_cast %5 : vector<1x3x16x16xf32> to vector<3x16x16xf32>
    %7 = arith.subf %4, %6 : vector<3x16x16xf32>
    %8 = arith.mulf %7, %7 : vector<3x16x16xf32>
    %9 = vector.shape_cast %8 : vector<3x16x16xf32> to vector<1x3x16x16xf32>
    %cst = arith.constant dense<0.000000e+00> : vector<1xf32>
    %10 = vector.multi_reduction <add>, %9, %cst [1, 2, 3] : vector<1x3x16x16xf32> to vector<1xf32>
    %11 = vector.shape_cast %10 : vector<1xf32> to vector<1x1x1x1xf32>
    %12 = vector.extract %11[0, 0, 0, 0] : f32 from vector<1x1x1x1xf32>
    %cst_8 = arith.constant 0.000000e+00 : f32
    %13 = arith.addf %cst_8, %12 : f32
    %14 = vector.extract_strided_slice %4 {offsets = [0, 0, 0], sizes = [1, 16, 16], strides = [1, 1, 1]} : vector<3x16x16xf32> to vector<1x16x16xf32>
    %15 = vector.shape_cast %14 : vector<1x16x16xf32> to vector<16x16xf32>
    %cst_9 = arith.constant 2.990000e-01 : f32
    %16 = vector.broadcast %cst_9 : f32 to vector<16x16xf32>
    %17 = arith.mulf %16, %15 : vector<16x16xf32>
    %18 = vector.extract_strided_slice %4 {offsets = [1, 0, 0], sizes = [1, 16, 16], strides = [1, 1, 1]} : vector<3x16x16xf32> to vector<1x16x16xf32>
    %19 = vector.shape_cast %18 : vector<1x16x16xf32> to vector<16x16xf32>
    %cst_10 = arith.constant 5.870000e-01 : f32
    %20 = vector.broadcast %cst_10 : f32 to vector<16x16xf32>
    %21 = arith.mulf %20, %19 : vector<16x16xf32>
    %22 = arith.addf %17, %21 : vector<16x16xf32>
    %23 = vector.extract_strided_slice %4 {offsets = [2, 0, 0], sizes = [1, 16, 16], strides = [1, 1, 1]} : vector<3x16x16xf32> to vector<1x16x16xf32>
    %24 = vector.shape_cast %23 : vector<1x16x16xf32> to vector<16x16xf32>
    %cst_11 = arith.constant 1.140000e-01 : f32
    %25 = vector.broadcast %cst_11 : f32 to vector<16x16xf32>
    %26 = arith.mulf %25, %24 : vector<16x16xf32>
    %27 = arith.addf %22, %26 : vector<16x16xf32>
    %28 = vector.extract_strided_slice %6 {offsets = [0, 0, 0], sizes = [1, 16, 16], strides = [1, 1, 1]} : vector<3x16x16xf32> to vector<1x16x16xf32>
    %29 = vector.shape_cast %28 : vector<1x16x16xf32> to vector<16x16xf32>
    %cst_12 = arith.constant 2.990000e-01 : f32
    %30 = vector.broadcast %cst_12 : f32 to vector<16x16xf32>
    %31 = arith.mulf %30, %29 : vector<16x16xf32>
    %32 = vector.extract_strided_slice %6 {offsets = [1, 0, 0], sizes = [1, 16, 16], strides = [1, 1, 1]} : vector<3x16x16xf32> to vector<1x16x16xf32>
    %33 = vector.shape_cast %32 : vector<1x16x16xf32> to vector<16x16xf32>
    %cst_13 = arith.constant 5.870000e-01 : f32
    %34 = vector.broadcast %cst_13 : f32 to vector<16x16xf32>
    %35 = arith.mulf %34, %33 : vector<16x16xf32>
    %36 = arith.addf %31, %35 : vector<16x16xf32>
    %37 = vector.extract_strided_slice %6 {offsets = [2, 0, 0], sizes = [1, 16, 16], strides = [1, 1, 1]} : vector<3x16x16xf32> to vector<1x16x16xf32>
    %38 = vector.shape_cast %37 : vector<1x16x16xf32> to vector<16x16xf32>
    %cst_14 = arith.constant 1.140000e-01 : f32
    %39 = vector.broadcast %cst_14 : f32 to vector<16x16xf32>
    %40 = arith.mulf %39, %38 : vector<16x16xf32>
    %41 = arith.addf %36, %40 : vector<16x16xf32>
    %42 = tpu.concatenate %27, %41 in 0 : vector<16x16xf32>, vector<16x16xf32> -> vector<32x16xf32>
    %c0_15 = arith.constant 0 : index
    %c0_16 = arith.constant 0 : index
    %43 = vector.load %arg7[%c0_15, %c0_16] : memref<16x256xf32, #tpu.memory_space<vmem>>, vector<16x256xf32>
    %cst_17 = arith.constant dense<0.000000e+00> : vector<32x256xf32>
    %44 = tpu.matmul %42, %43, %cst_17 {dimension_numbers = #tpu.dot_dimension_numbers<[1], [0], [0], [1], [0, 0, 1, 1], [], []>} : vector<32x16xf32>, vector<16x256xf32>, vector<32x256xf32> -> vector<32x256xf32>
    %c0_18 = arith.constant 0 : index
    %c0_19 = arith.constant 0 : index
    %c0_20 = arith.constant 0 : index
    %45 = vector.load %arg8[%c0_18, %c0_19, %c0_20] : memref<2x16x16xf32, #tpu.memory_space<vmem>>, vector<1x16x16xf32>
    %46 = vector.shape_cast %45 : vector<1x16x16xf32> to vector<16x16xf32>
    %c1 = arith.constant 1 : index
    %c0_21 = arith.constant 0 : index
    %c0_22 = arith.constant 0 : index
    %47 = vector.load %arg8[%c1, %c0_21, %c0_22] : memref<2x16x16xf32, #tpu.memory_space<vmem>>, vector<1x16x16xf32>
    %48 = vector.shape_cast %47 : vector<1x16x16xf32> to vector<16x16xf32>
    %49 = vector.extract_strided_slice %44 {offsets = [0, 0], sizes = [16, 256], strides = [1, 1]} : vector<32x256xf32> to vector<16x256xf32>
    %50 = vector.extract_strided_slice %44 {offsets = [16, 0], sizes = [16, 256], strides = [1, 1]} : vector<32x256xf32> to vector<16x256xf32>
    %51 = tpu.concatenate %49, %50 in 1 : vector<16x256xf32>, vector<16x256xf32> -> vector<16x512xf32>
    %cst_23 = arith.constant dense<0.000000e+00> : vector<16x512xf32>
    %52 = tpu.matmul %46, %51, %cst_23 {dimension_numbers = #tpu.dot_dimension_numbers<[1], [0], [0], [1], [0, 0, 1, 1], [], []>} : vector<16x16xf32>, vector<16x512xf32>, vector<16x512xf32> -> vector<16x512xf32>
    %cst_24 = arith.constant dense<0.000000e+00> : vector<16x512xf32>
    %53 = tpu.matmul %48, %51, %cst_24 {dimension_numbers = #tpu.dot_dimension_numbers<[1], [0], [0], [1], [0, 0, 1, 1], [], []>} : vector<16x16xf32>, vector<16x512xf32>, vector<16x512xf32> -> vector<16x512xf32>
    %54 = vector.extract_strided_slice %52 {offsets = [0, 0], sizes = [16, 128], strides = [1, 1]} : vector<16x512xf32> to vector<16x128xf32>
    %55 = vector.extract_strided_slice %53 {offsets = [0, 128], sizes = [16, 128], strides = [1, 1]} : vector<16x512xf32> to vector<16x128xf32>
    %56 = arith.addf %54, %55 : vector<16x128xf32>
    %57 = vector.extract_strided_slice %52 {offsets = [0, 128], sizes = [16, 128], strides = [1, 1]} : vector<16x512xf32> to vector<16x128xf32>
    %58 = vector.extract_strided_slice %53 {offsets = [0, 0], sizes = [16, 128], strides = [1, 1]} : vector<16x512xf32> to vector<16x128xf32>
    %59 = arith.subf %57, %58 : vector<16x128xf32>
    %60 = vector.extract_strided_slice %52 {offsets = [0, 256], sizes = [16, 128], strides = [1, 1]} : vector<16x512xf32> to vector<16x128xf32>
    %61 = vector.extract_strided_slice %53 {offsets = [0, 384], sizes = [16, 128], strides = [1, 1]} : vector<16x512xf32> to vector<16x128xf32>
    %62 = arith.addf %60, %61 : vector<16x128xf32>
    %63 = vector.extract_strided_slice %52 {offsets = [0, 384], sizes = [16, 128], strides = [1, 1]} : vector<16x512xf32> to vector<16x128xf32>
    %64 = vector.extract_strided_slice %53 {offsets = [0, 256], sizes = [16, 128], strides = [1, 1]} : vector<16x512xf32> to vector<16x128xf32>
    %65 = arith.subf %63, %64 : vector<16x128xf32>
    %66 = arith.mulf %56, %56 : vector<16x128xf32>
    %67 = arith.mulf %59, %59 : vector<16x128xf32>
    %68 = arith.addf %66, %67 : vector<16x128xf32>
    %69 = math.sqrt %68 : vector<16x128xf32>
    %cst_25 = arith.constant 6.250000e-02 : f32
    %70 = vector.broadcast %cst_25 : f32 to vector<16x128xf32>
    %71 = arith.mulf %69, %70 : vector<16x128xf32>
    %72 = arith.mulf %62, %62 : vector<16x128xf32>
    %73 = arith.mulf %65, %65 : vector<16x128xf32>
    %74 = arith.addf %72, %73 : vector<16x128xf32>
    %75 = math.sqrt %74 : vector<16x128xf32>
    %cst_26 = arith.constant 6.250000e-02 : f32
    %76 = vector.broadcast %cst_26 : f32 to vector<16x128xf32>
    %77 = arith.mulf %75, %76 : vector<16x128xf32>
    %78 = arith.subf %71, %77 : vector<16x128xf32>
    %79 = arith.mulf %78, %78 : vector<16x128xf32>
    %80 = vector.shape_cast %79 : vector<16x128xf32> to vector<1x16x128xf32>
    %cst_27 = arith.constant dense<0.000000e+00> : vector<1xf32>
    %81 = vector.multi_reduction <add>, %80, %cst_27 [1, 2] : vector<1x16x128xf32> to vector<1xf32>
    %82 = vector.shape_cast %81 : vector<1xf32> to vector<1x1x1xf32>
    %83 = vector.extract %82[0, 0, 0] : f32 from vector<1x1x1xf32>
    %cst_28 = arith.constant 0.000000e+00 : f32
    %84 = arith.addf %cst_28, %83 : f32
    %cst_29 = arith.constant 1.000000e+00 : f32
    %85 = arith.mulf %cst_29, %13 : f32
    %cst_30 = arith.constant 1.536000e+03 : f32
    %86 = arith.divf %85, %cst_30 : f32
    %cst_31 = arith.constant 1.000000e+00 : f32
    %87 = arith.mulf %cst_31, %84 : f32
    %cst_32 = arith.constant 2.880000e+02 : f32
    %88 = arith.divf %87, %cst_32 : f32
    %89 = arith.addf %86, %88 : f32
    %c0_33 = arith.constant 0 : index
    %c0_34 = arith.constant 0 : index
    %90 = vector.load %arg9[%c0_33, %c0_34] : memref<1x1xf32, #tpu.memory_space<vmem>>, vector<1x1xf32>
    %91 = vector.broadcast %89 : f32 to vector<1x1xf32>
    %92 = arith.addf %90, %91 : vector<1x1xf32>
    %c0_35 = arith.constant 0 : index
    %c0_36 = arith.constant 0 : index
    %93 = vector.load %arg9[%c0_35, %c0_36] : memref<1x1xf32, #tpu.memory_space<vmem>>, vector<1x1xf32>
    tpu.vector_store %arg9[%c0_35, %c0_36], %92 {strides = array<i32>} : memref<1x1xf32, #tpu.memory_space<vmem>>, vector<1x1xf32>,
    %c0_i32_37 = arith.constant 0 : i32
    %94 = arith.cmpi eq, %arg1, %c0_i32_37 : i32
    %95 = arith.extui %94 : i1 to i32
    %c0_i32_38 = arith.constant 0 : i32
    %96 = arith.cmpi ne, %95, %c0_i32_38 : i32
    scf.if %96 {
      %c0_39 = arith.constant 0 : index
      %c0_40 = arith.constant 0 : index
      %97 = vector.load %arg9[%c0_39, %c0_40] : memref<1x1xf32, #tpu.memory_space<vmem>>, vector<1x1xf32>
      %c0_41 = arith.constant 0 : index
      %c0_42 = arith.constant 0 : index
      %c0_43 = arith.constant 0 : index
      %98 = vector.load %arg6[%c0_41, %c0_42, %c0_43] : memref<1x1x1xf32, #tpu.memory_space<vmem>>, vector<1x1x1xf32>
      %99 = vector.shape_cast %98 : vector<1x1x1xf32> to vector<1x1xf32>
      %100 = vector.shape_cast %97 : vector<1x1xf32> to vector<1x1x1xf32>
      tpu.vector_store %arg6[%c0_41, %c0_42, %c0_43], %100 {strides = array<i32>} : memref<1x1x1xf32, #tpu.memory_space<vmem>>, vector<1x1x1xf32>,
    } else {
    }
    return
  }
  func.func @transform_0(%arg0: i32, %arg1: i32) -> (i32, i32, i32, i32) {
    %c1_i32 = arith.constant 1 : i32
    %0 = arith.muli %arg0, %c1_i32 : i32
    %1 = arith.addi %0, %arg1 : i32
    %c0_i32 = arith.constant 0 : i32
    %c0_i32_0 = arith.constant 0 : i32
    %c0_i32_1 = arith.constant 0 : i32
    %c0_i32_2 = arith.constant 0 : i32
    return %1, %c0_i32, %c0_i32_0, %c0_i32_1 : i32, i32, i32, i32
  }
  func.func @transform_1(%arg0: i32, %arg1: i32) -> (i32, i32, i32, i32) {
    %c1_i32 = arith.constant 1 : i32
    %0 = arith.muli %arg0, %c1_i32 : i32
    %1 = arith.addi %0, %arg1 : i32
    %c0_i32 = arith.constant 0 : i32
    %c0_i32_0 = arith.constant 0 : i32
    %c0_i32_1 = arith.constant 0 : i32
    %c0_i32_2 = arith.constant 0 : i32
    return %1, %c0_i32, %c0_i32_0, %c0_i32_1 : i32, i32, i32, i32
  }
  func.func @transform_4(%arg0: i32, %arg1: i32) -> (i32, i32, i32) {
    %c0_i32 = arith.constant 0 : i32
    %c0_i32_0 = arith.constant 0 : i32
    %c0_i32_1 = arith.constant 0 : i32
    return %arg0, %c0_i32, %c0_i32_0 : i32, i32, i32
  }
}

</mosaic_0001>

<llo_original>
// kernel: tpu_custom_call.1
$region0: #{tpu_custom_call.1}
  #allocation0 [shape = 'u32[]', space=smem, size = 0x4, offset = 0x4, fixed_abs, tag = 'smem constant byte address 0x4 - core index']
  #allocation1 [shape = 'u32[144,128]{1,0:T(1,128)}', space=vmem, size = 0x12000, scoped, tag = 'internal scratch']
  #allocation2 [shape = 'f32[16,256]{1,0:T(8,128)}', space=vmem, size = 0x4000, scoped, tag = 'scratch operand']
  #allocation3 [shape = 'f32[2,16,16]{2,1,0:T(8,128)}', space=vmem, size = 0x4000, scoped, tag = 'scratch operand']
  #allocation4 [shape = 'f32[1,1]{1,0:T(1,128)}', space=vmem, size = 0x200, scoped, tag = 'scratch operand']
  #allocation5 [shape = 's32[2]{0}', space=sflag, size = 0x8, scoped, tag = 'scratch operand']
  #allocation10 [shape = 's32[]', space=sflag, size = 0x4, offset = 0, fixed_abs, tag = 'sflag constant byte address 0x0 - dummy sync flag']
  #allocation11 [shape = 's32[]', space=sflag, size = 0x4, offset = 0, fixed_abs, tag = 'sflag constant byte address 0x0 - dummy sync flag']
  #allocation12 [shape = 'u32[]', space=smem, size = 0x4, offset = 0x44, fixed_abs, tag = 'smem constant byte address 0x44 - assertion arg 0']
  #allocation13 [shape = 'u32[]', space=smem, size = 0x4, offset = 0x48, fixed_abs, tag = 'smem constant byte address 0x48 - assertion arg 1']
  #allocation14 [shape = 's32[]', space=sflag, size = 0x4, offset = 0, fixed_abs, tag = 'sflag constant byte address 0x0 - dummy sync flag']
  #allocation15 [shape = 's32[]', space=sflag, size = 0x4, offset = 0, fixed_abs, tag = 'sflag constant byte address 0x0 - dummy sync flag']
  %s0 = inlined_call_operand.hbm [shape: f32[2,3,16,16], index: 0, kind: input, shape index: {}]
  %s1 = inlined_call_operand.hbm [shape: f32[2,3,16,16], index: 1, kind: input, shape index: {}]
  %s2 = inlined_call_operand.hbm [shape: f32[16,256], index: 2, kind: input, shape index: {}]
  %s3 = inlined_call_operand.hbm [shape: f32[2,16,16], index: 3, kind: input, shape index: {}]
  %s4 = inlined_call_operand.vmem [shape: f32[2,1,1], index: 4, kind: output, shape index: {}]
  %s5 = sld [smem:[#allocation0]]
  $region65: #{tpu_custom_call.1} parent=0
    _
  %s7 = ssub.s32 1, %s5
  %s8 = scalar_select 0, %s7, %s5
  $region1: #{tpu_custom_call.1} parent=0
    #allocation6 [shape = 'u8[49152]{0}', space=vmem, size = 0xc000, scoped, tag = 'input window, operand 0']
    #allocation7 [shape = 's32[2]{0}', space=sflag, size = 0x8, scoped, tag = 'scoped memory for tpu_custom_call.1']
    #allocation8 [shape = 'u8[49152]{0}', space=vmem, size = 0xc000, scoped, tag = 'input window, operand 1']
    #allocation9 [shape = 's32[2]{0}', space=sflag, size = 0x8, scoped, tag = 'scoped memory for tpu_custom_call.1']
    %9 = vsyncpa [#allocation7], 0
    %s10 = scalar_lea.sflag [#allocation7], 1
    %11 = vsyncpa %s10, 0
    %12 = vsyncpa [#allocation9], 0
    %s13 = scalar_lea.sflag [#allocation9], 1
    %14 = vsyncpa %s13, 0
    loop: start=0, step=1, limit=4
    $region2: #{tpu_custom_call.1} parent=1 // loop_pre_header
      _
    $region3: #{tpu_custom_call.1} parent=1 // loop_header
      %s16 = sphi 0, %s20
      %p17 = scmp.ge.s32.totalorder %s16, 4
      %s23 = sphi 0, %s35
      %s24 = sphi 0, %s31
      %s25 = sphi 0, %s23
      %s26 = sphi 0, %s24
      %s27 = sphi 0, %s25
      %s28 = sphi 0, %s26
      %s40 = sphi 0, %s42
      %s43 = sphi 0, %s40
      %s44 = sphi 0, %s43
      %s60 = sphi 0, %s44
      %s68 = sphi 0, %s70
      %s71 = sphi 0, %s68
      %s72 = sphi 0, %s71
      %s88 = sphi 0, %s72
      %s94 = sphi 0, %s96
      %s97 = sphi 0, %s94
      %s98 = sphi 0, %s97
      %s114 = sphi 0, %s98
    $region4: #{tpu_custom_call.1} parent=1 // loop_header_branch
      %19 = sbr.rel (%p17) target = $region8
    $region5: #{tpu_custom_call.1} parent=1 // loop_body
      %s21 = ssub.s32 %s16, 1
      %s22 = ssub.s32 %s16, 2
      %s29 = sadd.s32 1, %s24
      %p30 = scmp.ge.s32.totalorder %s29, 1
      %s31 = scalar_select %p30, 0, %s29
      %s32 = sadd.s32 1, %s23
      %s33 = scalar_select %p30, %s32, %s23
      %p34 = scmp.ge.s32.totalorder %s33, 2
      %s35 = scalar_select %p34, 0, %s33
      %s36 = sadd.s32 %s23, %s24
      %s37 = sadd.s32 %s35, %s31
      %s38 = ssub.s32 %s36, %s37
      %p39 = scmp.eq.s32.totalorder %s38, 0
      %s41 = sadd.s32 %s40, 1
      %s42 = scalar_select %p39, %s40, %s41
      %p45 = pneg %p39
      %p46 = scmp.eq.s32.totalorder %s16, 1
      %p47 = por %p45, %p46
      %p48 = scmp.ne.s32.totalorder %s40, %s43
      %p49 = scmp.eq.s32.totalorder %s16, 0
      %p50 = por %p48, %p49
      %p51 = scmp.ne.s32.totalorder %s40, %s43
      %p52 = scmp.eq.s32.totalorder %s21, 1
      %p53 = por %p51, %p52
      %p54 = scmp.ne.s32.totalorder %s43, %s44
      %p55 = scmp.eq.s32.totalorder %s21, 0
      %p56 = por %p54, %p55
      %p57 = scmp.ne.s32.totalorder %s43, %s44
      %p58 = scmp.eq.s32.totalorder %s22, 1
      %p59 = por %p57, %p58
      %p61 = scmp.ne.s32.totalorder %s44, %s60
      %p62 = scmp.eq.s32.totalorder %s22, 0
      %p63 = por %p61, %p62
      %s64 = sadd.s32 %s23, %s24
      %s65 = sadd.s32 %s35, %s31
      %s66 = ssub.s32 %s64, %s65
      %p67 = scmp.eq.s32.totalorder %s66, 0
      %s69 = sadd.s32 %s68, 1
      %s70 = scalar_select %p67, %s68, %s69
      %p73 = pneg %p67
      %p74 = scmp.eq.s32.totalorder %s16, 1
      %p75 = por %p73, %p74
      %p76 = scmp.ne.s32.totalorder %s68, %s71
      %p77 = scmp.eq.s32.totalorder %s16, 0
      %p78 = por %p76, %p77
      %p79 = scmp.ne.s32.totalorder %s68, %s71
      %p80 = scmp.eq.s32.totalorder %s21, 1
      %p81 = por %p79, %p80
      %p82 = scmp.ne.s32.totalorder %s71, %s72
      %p83 = scmp.eq.s32.totalorder %s21, 0
      %p84 = por %p82, %p83
      %p85 = scmp.ne.s32.totalorder %s71, %s72
      %p86 = scmp.eq.s32.totalorder %s22, 1
      %p87 = por %p85, %p86
      %p89 = scmp.ne.s32.totalorder %s72, %s88
      %p90 = scmp.eq.s32.totalorder %s22, 0
      %p91 = por %p89, %p90
      %s92 = ssub.s32 %s23, %s35
      %p93 = scmp.eq.s32.totalorder %s92, 0
      %s95 = sadd.s32 %s94, 1
      %s96 = scalar_select %p93, %s94, %s95
      %p99 = pneg %p93
      %p100 = scmp.eq.s32.totalorder %s16, 1
      %p101 = por %p99, %p100
      %p102 = scmp.ne.s32.totalorder %s94, %s97
      %p103 = scmp.eq.s32.totalorder %s16, 0
      %p104 = por %p102, %p103
      %p105 = scmp.ne.s32.totalorder %s94, %s97
      %p106 = scmp.eq.s32.totalorder %s21, 1
      %p107 = por %p105, %p106
      %p108 = scmp.ne.s32.totalorder %s97, %s98
      %p109 = scmp.eq.s32.totalorder %s21, 0
      %p110 = por %p108, %p109
      %p111 = scmp.ne.s32.totalorder %s97, %s98
      %p112 = scmp.eq.s32.totalorder %s22, 1
      %p113 = por %p111, %p112
      %p115 = scmp.ne.s32.totalorder %s98, %s114
      %p116 = scmp.eq.s32.totalorder %s22, 0
      %p117 = por %p115, %p116
      %p118 = scmp.le.s32.totalorder 1, %s16
      %p119 = scmp.lt.s32.totalorder %s16, 3
      %p120 = pnand %p118, %p119
      %p121 = pneg %p120
      // Predicated region
      $region9: #{tpu_custom_call.1} parent=5 // pred_check
        _
      $region10: #{tpu_custom_call.1} parent=5 // pred_check_branch
        %123 = sbr.rel (%p120) target = $region12
      $region11: #{tpu_custom_call.1} parent=5 // pred_region
        %s124 = ssub.s32 %s16, 1
      $region12: #{tpu_custom_call.1} parent=5 // pred_fallthru
        _
      %p125 = scmp.lt.s32.totalorder %s16, 2
      // Predicated region
      $region13: #{tpu_custom_call.1} parent=5 // pred_check
        %p126 = pneg %p125
      $region14: #{tpu_custom_call.1} parent=5 // pred_check_branch
        %128 = sbr.rel (%p126) target = $region16
      $region15: #{tpu_custom_call.1} parent=5 // pred_region
        // Predicated region
        $region17: #{tpu_custom_call.1} parent=15 // pred_check
          %p129 = pneg %p50
        $region18: #{tpu_custom_call.1} parent=15 // pred_check_branch
          %131 = sbr.rel (%p129) target = $region20
        $region19: #{tpu_custom_call.1} parent=15 // pred_region
          %s132 = sand.u32 %s40, 1
          %s133 = scalar_lea.sflag [#allocation7], %s132
          %s134 = sand.u32 %s40, 1
          %s135 = smul.addr %s134, 48
          %s136 = scalar_lea.vmem [#allocation6], %s135
          %s137 = sadd.s32 %s23, %s24
          %s139 = ssub.s32 768, 768
          %140 = vsyncadd %s133, %s139
          %s141 = smul.addr %s137, 6
          %s142 = smul.addr %s141, 128
          %s143 = scalar_lea.hbm %s0, %s142
          %s144 = sshll.u32 %s136, 4
          %s145 = int_to_ptr.vmem [resolvable:$true] %s144
          %150 = dma.hbm_to_vmem [thread:$0]  %s143, 768, %s145, %s133, 128, 128, 8
        $region20: #{tpu_custom_call.1} parent=15 // pred_fallthru
          _
        // Predicated region
        $region21: #{tpu_custom_call.1} parent=15 // pred_check
          %p151 = pneg %p78
        $region22: #{tpu_custom_call.1} parent=15 // pred_check_branch
          %153 = sbr.rel (%p151) target = $region24
        $region23: #{tpu_custom_call.1} parent=15 // pred_region
          %s154 = sand.u32 %s68, 1
          %s155 = scalar_lea.sflag [#allocation9], %s154
          %s156 = sand.u32 %s68, 1
          %s157 = smul.addr %s156, 48
          %s158 = scalar_lea.vmem [#allocation8], %s157
          %s159 = sadd.s32 %s23, %s24
          %s161 = ssub.s32 768, 768
          %162 = vsyncadd %s155, %s161
          %s163 = smul.addr %s159, 6
          %s164 = smul.addr %s163, 128
          %s165 = scalar_lea.hbm %s1, %s164
          %s166 = sshll.u32 %s158, 4
          %s167 = int_to_ptr.vmem [resolvable:$true] %s166
          %172 = dma.hbm_to_vmem [thread:$0]  %s165, 768, %s167, %s155, 128, 128, 8
        $region24: #{tpu_custom_call.1} parent=15 // pred_fallthru
          _
      $region16: #{tpu_custom_call.1} parent=5 // pred_fallthru
        _
      %p173 = scmp.le.s32.totalorder 1, %s16
      %p174 = scmp.lt.s32.totalorder %s16, 3
      %p175 = pnand %p173, %p174
      %p176 = pneg %p175
      // Predicated region
      $region25: #{tpu_custom_call.1} parent=5 // pred_check
        _
      $region26: #{tpu_custom_call.1} parent=5 // pred_check_branch
        %178 = sbr.rel (%p175) target = $region28
      $region27: #{tpu_custom_call.1} parent=5 // pred_region
        %s179 = ssub.s32 %s16, 1
        %s180 = sand.u32 %s43, 1
        %s181 = scalar_lea.sflag [#allocation7], %s180
        %s182 = sand.u32 %s43, 1
        %s183 = smul.addr %s182, 48
        %s184 = scalar_lea.vmem [#allocation6], %s183
        // Predicated region
        $region29: #{tpu_custom_call.1} parent=27 // pred_check
          %p185 = pneg %p56
        $region30: #{tpu_custom_call.1} parent=27 // pred_check_branch
          %187 = sbr.rel (%p185) target = $region32
        $region31: #{tpu_custom_call.1} parent=27 // pred_region
          %188 = dma.done %s181, 768
        $region32: #{tpu_custom_call.1} parent=27 // pred_fallthru
          _
        %s189 = sand.u32 %s71, 1
        %s190 = scalar_lea.sflag [#allocation9], %s189
        %s191 = sand.u32 %s71, 1
        %s192 = smul.addr %s191, 48
        %s193 = scalar_lea.vmem [#allocation8], %s192
        // Predicated region
        $region33: #{tpu_custom_call.1} parent=27 // pred_check
          %p194 = pneg %p84
        $region34: #{tpu_custom_call.1} parent=27 // pred_check_branch
          %196 = sbr.rel (%p194) target = $region36
        $region35: #{tpu_custom_call.1} parent=27 // pred_region
          %197 = dma.done %s190, 768
        $region36: #{tpu_custom_call.1} parent=27 // pred_fallthru
          _
        %s198 = sand.u32 %s43, 1
        %s199 = scalar_lea.sflag [#allocation7], %s198
        %s200 = sand.u32 %s43, 1
        %s201 = smul.addr %s200, 48
        %s202 = scalar_lea.vmem [#allocation6], %s201
        %p203 = pneg %p56
        %p204 = pneg %p53
        %s205 = sand.u32 %s71, 1
        %s206 = scalar_lea.sflag [#allocation9], %s205
        %s207 = sand.u32 %s71, 1
        %s208 = smul.addr %s207, 48
        %s209 = scalar_lea.vmem [#allocation8], %s208
        %p210 = pneg %p84
        %p211 = pneg %p81
        %p212 = pneg %p110
        %p213 = pneg %p107
        %p214 = scmp.lt.s32.totalorder %s25, 1
        %s215 = scalar_select %p214, %s25, 1
        %s216 = scalar_lea.vmem %s4, %s215
        %s217 = sadd.s32 %s25, %s26
        %s218 = sadd.s32 %s25, %s26
        %p219 = scmp.lt.s32.totalorder %s25, 1
        %s220 = scalar_select %p219, %s25, 1
        %s221 = scalar_lea.vmem %s4, %s220
        %p222 = scmp.eq.s32.totalorder %s26, 0
        // Predicated region
        $region37: #{tpu_custom_call.1} parent=27 // pred_check
          %p223 = pneg %p222
        $region38: #{tpu_custom_call.1} parent=27 // pred_check_branch
          %225 = sbr.rel (%p223) target = $region40
        $region39: #{tpu_custom_call.1} parent=27 // pred_region
          // Predicated region
          $region41: #{tpu_custom_call.1} parent=39 // pred_check
            _
          $region42: #{tpu_custom_call.1} parent=39 // pred_check_branch
            %227 = sbr.rel target = $region44
          $region43: #{tpu_custom_call.1} parent=39 // pred_region
            %228 = sst [smem:[#allocation12]] [#allocation11]
            %229 = sst [smem:[#allocation13]] [#allocation10]
          $region44: #{tpu_custom_call.1} parent=39 // pred_fallthru
            _
          %231 = shalt.err (0)
          %s233 = sshll.u32 [#allocation2], 4
          %s234 = int_to_ptr.vmem [resolvable:$true] %s233
          %236 = dma.hbm_to_vmem [thread:$0]  %s2, 512, %s234, [#allocation5]
          %s237 = scalar_lea.sflag [#allocation5], 1
          // Predicated region
          $region45: #{tpu_custom_call.1} parent=39 // pred_check
            _
          $region46: #{tpu_custom_call.1} parent=39 // pred_check_branch
            %239 = sbr.rel target = $region48
          $region47: #{tpu_custom_call.1} parent=39 // pred_region
            %240 = sst [smem:[#allocation12]] [#allocation15]
            %241 = sst [smem:[#allocation13]] [#allocation14]
          $region48: #{tpu_custom_call.1} parent=39 // pred_fallthru
            _
          %243 = shalt.err (0)
          %s245 = sshll.u32 [#allocation3], 4
          %s246 = int_to_ptr.vmem [resolvable:$true] %s245
          %248 = dma.hbm_to_vmem [thread:$0]  %s3, 512, %s246, %s237
          %s249 = smul.u32 8, 2
          %s250 = smul.u32 %s249, 2
          %s251 = sshll.u32 %s250, 4
          %252 = dma.done [#allocation5], %s251
          %s253 = smul.u32 2, 16
          %s254 = smul.u32 %s253, 1
          %s255 = sshll.u32 %s254, 4
          %256 = dma.done %s237, %s255
          %vm257 = vcmask 0
          %258 = vst.msk [vmem:[#allocation4] sm:$0x1] %vm257, 0.0
        $region40: #{tpu_custom_call.1} parent=27 // pred_fallthru
          _
        %v259 = vld [vmem:[%s184] sm:$0xff]
        %v260 = vld [vmem:[%s184 + $0x8] sm:$0xff]
        %v261 = vld [vmem:[%s184 + $0x10] sm:$0xff]
        %v262 = vld [vmem:[%s184 + $0x18] sm:$0xff]
        %v263 = vld [vmem:[%s184 + $0x20] sm:$0xff]
        %v264 = vld [vmem:[%s184 + $0x28] sm:$0xff]
        %v265 = vld [vmem:[%s193] sm:$0xff]
        %v266 = vld [vmem:[%s193 + $0x8] sm:$0xff]
        %v267 = vld [vmem:[%s193 + $0x10] sm:$0xff]
        %v268 = vld [vmem:[%s193 + $0x18] sm:$0xff]
        %v269 = vld [vmem:[%s193 + $0x20] sm:$0xff]
        %v270 = vld [vmem:[%s193 + $0x28] sm:$0xff]
        %v271 = vsub.f32 %v259, %v265
        %v272 = vsub.f32 %v260, %v266
        %v273 = vsub.f32 %v261, %v267
        %v274 = vsub.f32 %v262, %v268
        %v275 = vsub.f32 %v263, %v269
        %v276 = vsub.f32 %v264, %v270
        %v277 = vmul.f32 %v271, %v271
        %v278 = vmul.f32 %v272, %v272
        %v279 = vmul.f32 %v273, %v273
        %v280 = vmul.f32 %v274, %v274
        %v281 = vmul.f32 %v275, %v275
        %v282 = vmul.f32 %v276, %v276
        %vm283 = vcmask 130048
        %v284 = vsel %vm283, %v277, 0.0
        %v285 = vsel %vm283, %v278, 0.0
        %v286 = vadd.f32 %v284, %v285
        %v287 = vsel %vm283, %v279, 0.0
        %v288 = vadd.f32 %v286, %v287
        %v289 = vsel %vm283, %v280, 0.0
        %v290 = vadd.f32 %v288, %v289
        %v291 = vsel %vm283, %v281, 0.0
        %v292 = vadd.f32 %v290, %v291
        %v293 = vsel %vm283, %v282, 0.0
        %v294 = vadd.f32 %v292, %v293
        %295 = vadd.xlane.f32.xlu0 %v294
        %v296 = vpop.xlane.xlu0 %295
        %v297 = vrot.slane %v296, 4
        %v298 = vadd.f32 %v296, %v297
        %v299 = vrot.slane %v298, 2
        %v300 = vadd.f32 %v298, %v299
        %v301 = vrot.slane %v300, 1
        %v302 = vadd.f32 %v300, %v301
        %s303 = vtos %v302
        %s304 = sadd.f32 %s303, 0.0
        %v305 = vmul.f32 %v259, 0.299
        %v306 = vmul.f32 %v260, 0.299
        %v307 = vmul.f32 %v261, 0.587
        %v308 = vmul.f32 %v262, 0.587
        %v309 = vadd.f32 %v305, %v307
        %v310 = vadd.f32 %v306, %v308
        %v311 = vmul.f32 %v263, 0.114
        %v312 = vmul.f32 %v264, 0.114
        %v313 = vadd.f32 %v309, %v311
        %v314 = vadd.f32 %v310, %v312
        %v315 = vmul.f32 %v265, 0.299
        %v316 = vmul.f32 %v266, 0.299
        %v317 = vmul.f32 %v267, 0.587
        %v318 = vmul.f32 %v268, 0.587
        %v319 = vadd.f32 %v315, %v317
        %v320 = vadd.f32 %v316, %v318
        %v321 = vmul.f32 %v269, 0.114
        %v322 = vmul.f32 %v270, 0.114
        %v323 = vadd.f32 %v319, %v321
        %v324 = vadd.f32 %v320, %v322
        %v325 = vld [vmem:[#allocation2] sm:$0xff]
        %v326 = vld [vmem:[#allocation2 + $0x8] sm:$0xff]
        %v327 = vld [vmem:[#allocation2 + $0x10] sm:$0xff]
        %v328 = vld [vmem:[#allocation2 + $0x18] sm:$0xff]
        %v330 = vsel %vm283, %v313, 0
        %v333 = vsel %vm283, %v314, 0
        %v336 = vsel %vm283, %v323, 0
        %v339 = vsel %vm283, %v324, 0
        %341 = vmatprep.subr.mxu0 %v326
        %342 = vmatpush1.msra.mxu0 %v325
        %343 = vmatprep.subr.mxu0 %v328
        %344 = vmatpush1.msra.mxu0 %v327
        %345 = vmatprep.subr.mxu0 0.0
        %346 = vmatpush1.msra.mxu0 0.0
        %347 = vmatprep.subr.mxu0 0.0
        %348 = vmatpush1.msra.mxu0 0.0
        %349 = vmatprep.subr.mxu0 0.0
        %350 = vmatpush1.msra.mxu0 0.0
        %351 = vmatprep.subr.mxu0 0.0
        %352 = vmatpush1.msra.mxu0 0.0
        %353 = vmatprep.subr.mxu0 0.0
        %354 = vmatpush1.msra.mxu0 0.0
        %355 = vmatprep.subr.mxu0 0.0
        %356 = vmatpush1.msra.mxu0 0.0
        %357 = vmatprep.subr.mxu0 0.0
        %358 = vmatpush1.msra.mxu0 0.0
        %359 = vmatprep.subr.mxu0 0.0
        %360 = vmatpush1.msra.mxu0 0.0
        %361 = vmatprep.subr.mxu0 0.0
        %362 = vmatpush1.msra.mxu0 0.0
        %363 = vmatprep.subr.mxu0 0.0
        %364 = vmatpush1.msra.mxu0 0.0
        %365 = vmatprep.subr.mxu0 0.0
        %366 = vmatpush1.msra.mxu0 0.0
        %367 = vmatprep.subr.mxu0 0.0
        %368 = vmatpush1.msra.mxu0 0.0
        %369 = vmatprep.subr.mxu0 0.0
        %370 = vmatpush1.msra.mxu0 0.0
        %371 = vmatprep.subr.mxu0 0.0
        %372 = vmatpush1.msra.mxu0 0.0
        %373 = vmatprep.subr.mxu0 0.0
        %374 = vmatpush1.msra.mxu0 0.0
        %375 = vmatprep.subr.mxu0 0.0
        %376 = vmatpush1.msra.mxu0 0.0
        %377 = vmatprep.subr.mxu0 0.0
        %378 = vmatpush1.msra.mxu0 0.0
        %379 = vmatprep.subr.mxu0 0.0
        %380 = vmatpush1.msra.mxu0 0.0
        %381 = vmatprep.subr.mxu0 0.0
        %382 = vmatpush1.msra.mxu0 0.0
        %383 = vmatprep.subr.mxu0 0.0
        %384 = vmatpush1.msra.mxu0 0.0
        %385 = vmatprep.subr.mxu0 0.0
        %386 = vmatpush1.msra.mxu0 0.0
        %387 = vmatprep.subr.mxu0 0.0
        %388 = vmatpush1.msra.mxu0 0.0
        %389 = vmatprep.subr.mxu0 0.0
        %390 = vmatpush1.msra.mxu0 0.0
        %391 = vmatprep.subr.mxu0 0.0
        %392 = vmatpush1.msra.mxu0 0.0
        %393 = vmatprep.subr.mxu0 0.0
        %394 = vmatpush1.msra.mxu0 0.0
        %395 = vmatprep.subr.mxu0 0.0
        %396 = vmatpush1.msra.mxu0 0.0
        %397 = vmatprep.subr.mxu0 0.0
        %398 = vmatpush1.msra.mxu0 0.0
        %399 = vmatprep.subr.mxu0 0.0
        %400 = vmatpush1.msra.mxu0 0.0
        %401 = vmatprep.subr.mxu0 0.0
        %402 = vmatpush1.msra.mxu0 0.0
        %403 = vmatprep.subr.mxu0 0.0
        %404 = vmatpush1.msra.mxu0 0.0
        %405 = vmatprep.mubr.f32.mxu0 0.0
        %406 = vmatmul.mubr.f32.gmra.mrb[0].mxu0 %v330
        %v407 = vpop.f32.mrb[0].mxu0
        %v408 = vadd.f32 0.0, %v407
        %v409 = vpop.f32.mrb[0].mxu0
        %v410 = vadd.f32 0.0, %v409
        %411 = vmatprep.mubr.f32.mxu0 0.0
        %412 = vmatmul.mubr.f32.gmra.mrb[0].mxu0 %v333
        %v413 = vpop.f32.mrb[0].mxu0
        %v414 = vadd.f32 0.0, %v413
        %v415 = vpop.f32.mrb[0].mxu0
        %v416 = vadd.f32 0.0, %v415
        %417 = vmatprep.mubr.f32.mxu0 0.0
        %418 = vmatmul.mubr.f32.gmra.mrb[0].mxu0 %v336
        %v419 = vpop.f32.mrb[0].mxu0
        %v420 = vadd.f32 0.0, %v419
        %v421 = vpop.f32.mrb[0].mxu0
        %v422 = vadd.f32 0.0, %v421
        %423 = vmatprep.mubr.f32.mxu0 0.0
        %424 = vmatmul.mubr.f32.gmra.mrb[0].mxu0 %v339
        %v425 = vpop.f32.mrb[0].mxu0
        %v426 = vadd.f32 0.0, %v425
        %v427 = vpop.f32.mrb[0].mxu0
        %v428 = vadd.f32 0.0, %v427
        %429 = vdwg.mxu0
        %v430 = vld [vmem:[#allocation3] sm:$0xff]
        %v431 = vld [vmem:[#allocation3 + $0x8] sm:$0xff]
        %s432 = scalar_lea.vmem [#allocation3], 16
        %v433 = vld [vmem:[%s432] sm:$0xff]
        %v434 = vld [vmem:[%s432 + $0x8] sm:$0xff]
        %v436 = vsel %vm283, %v430, 0
        %v439 = vsel %vm283, %v431, 0
        %441 = vmatprep.subr.mxu0 %v410
        %442 = vmatpush1.msra.mxu0 %v408
        %443 = vmatprep.subr.mxu0 %v416
        %444 = vmatpush1.msra.mxu0 %v414
        %445 = vmatprep.subr.mxu0 0.0
        %446 = vmatpush1.msra.mxu0 0.0
        %447 = vmatprep.subr.mxu0 0.0
        %448 = vmatpush1.msra.mxu0 0.0
        %449 = vmatprep.subr.mxu0 0.0
        %450 = vmatpush1.msra.mxu0 0.0
        %451 = vmatprep.subr.mxu0 0.0
        %452 = vmatpush1.msra.mxu0 0.0
        %453 = vmatprep.subr.mxu0 0.0
        %454 = vmatpush1.msra.mxu0 0.0
        %455 = vmatprep.subr.mxu0 0.0
        %456 = vmatpush1.msra.mxu0 0.0
        %457 = vmatprep.subr.mxu0 0.0
        %458 = vmatpush1.msra.mxu0 0.0
        %459 = vmatprep.subr.mxu0 0.0
        %460 = vmatpush1.msra.mxu0 0.0
        %461 = vmatprep.subr.mxu0 0.0
        %462 = vmatpush1.msra.mxu0 0.0
        %463 = vmatprep.subr.mxu0 0.0
        %464 = vmatpush1.msra.mxu0 0.0
        %465 = vmatprep.subr.mxu0 0.0
        %466 = vmatpush1.msra.mxu0 0.0
        %467 = vmatprep.subr.mxu0 0.0
        %468 = vmatpush1.msra.mxu0 0.0
        %469 = vmatprep.subr.mxu0 0.0
        %470 = vmatpush1.msra.mxu0 0.0
        %471 = vmatprep.subr.mxu0 0.0
        %472 = vmatpush1.msra.mxu0 0.0
        %473 = vmatprep.subr.mxu0 0.0
        %474 = vmatpush1.msra.mxu0 0.0
        %475 = vmatprep.subr.mxu0 0.0
        %476 = vmatpush1.msra.mxu0 0.0
        %477 = vmatprep.subr.mxu0 0.0
        %478 = vmatpush1.msra.mxu0 0.0
        %479 = vmatprep.subr.mxu0 0.0
        %480 = vmatpush1.msra.mxu0 0.0
        %481 = vmatprep.subr.mxu0 0.0
        %482 = vmatpush1.msra.mxu0 0.0
        %483 = vmatprep.subr.mxu0 0.0
        %484 = vmatpush1.msra.mxu0 0.0
        %485 = vmatprep.subr.mxu0 0.0
        %486 = vmatpush1.msra.mxu0 0.0
        %487 = vmatprep.subr.mxu0 0.0
        %488 = vmatpush1.msra.mxu0 0.0
        %489 = vmatprep.subr.mxu0 0.0
        %490 = vmatpush1.msra.mxu0 0.0
        %491 = vmatprep.subr.mxu0 0.0
        %492 = vmatpush1.msra.mxu0 0.0
        %493 = vmatprep.subr.mxu0 0.0
        %494 = vmatpush1.msra.mxu0 0.0
        %495 = vmatprep.subr.mxu0 0.0
        %496 = vmatpush1.msra.mxu0 0.0
        %497 = vmatprep.subr.mxu0 0.0
        %498 = vmatpush1.msra.mxu0 0.0
        %499 = vmatprep.subr.mxu0 0.0
        %500 = vmatpush1.msra.mxu0 0.0
        %501 = vmatprep.subr.mxu0 0.0
        %502 = vmatpush1.msra.mxu0 0.0
        %503 = vmatprep.subr.mxu0 0.0
        %504 = vmatpush1.msra.mxu0 0.0
        %505 = vmatprep.mubr.f32.mxu0 0.0
        %506 = vmatmul.mubr.f32.gmra.mrb[0].mxu0 %v436
        %v507 = vpop.f32.mrb[0].mxu0
        %v508 = vadd.f32 0.0, %v507
        %v509 = vpop.f32.mrb[0].mxu0
        %v510 = vadd.f32 0.0, %v509
        %511 = vmatprep.mubr.f32.mxu0 0.0
        %512 = vmatmul.mubr.f32.gmra.mrb[0].mxu0 %v439
        %v513 = vpop.f32.mrb[0].mxu0
        %v514 = vadd.f32 0.0, %v513
        %v515 = vpop.f32.mrb[0].mxu0
        %v516 = vadd.f32 0.0, %v515
        %517 = vdwg.mxu0
        %518 = vmatprep.subr.mxu0 %v422
        %519 = vmatpush1.msra.mxu0 %v420
        %520 = vmatprep.subr.mxu0 %v428
        %521 = vmatpush1.msra.mxu0 %v426
        %522 = vmatprep.subr.mxu0 0.0
        %523 = vmatpush1.msra.mxu0 0.0
        %524 = vmatprep.subr.mxu0 0.0
        %525 = vmatpush1.msra.mxu0 0.0
        %526 = vmatprep.subr.mxu0 0.0
        %527 = vmatpush1.msra.mxu0 0.0
        %528 = vmatprep.subr.mxu0 0.0
        %529 = vmatpush1.msra.mxu0 0.0
        %530 = vmatprep.subr.mxu0 0.0
        %531 = vmatpush1.msra.mxu0 0.0
        %532 = vmatprep.subr.mxu0 0.0
        %533 = vmatpush1.msra.mxu0 0.0
        %534 = vmatprep.subr.mxu0 0.0
        %535 = vmatpush1.msra.mxu0 0.0
        %536 = vmatprep.subr.mxu0 0.0
        %537 = vmatpush1.msra.mxu0 0.0
        %538 = vmatprep.subr.mxu0 0.0
        %539 = vmatpush1.msra.mxu0 0.0
        %540 = vmatprep.subr.mxu0 0.0
        %541 = vmatpush1.msra.mxu0 0.0
        %542 = vmatprep.subr.mxu0 0.0
        %543 = vmatpush1.msra.mxu0 0.0
        %544 = vmatprep.subr.mxu0 0.0
        %545 = vmatpush1.msra.mxu0 0.0
        %546 = vmatprep.subr.mxu0 0.0
        %547 = vmatpush1.msra.mxu0 0.0
        %548 = vmatprep.subr.mxu0 0.0
        %549 = vmatpush1.msra.mxu0 0.0
        %550 = vmatprep.subr.mxu0 0.0
        %551 = vmatpush1.msra.mxu0 0.0
        %552 = vmatprep.subr.mxu0 0.0
        %553 = vmatpush1.msra.mxu0 0.0
        %554 = vmatprep.subr.mxu0 0.0
        %555 = vmatpush1.msra.mxu0 0.0
        %556 = vmatprep.subr.mxu0 0.0
        %557 = vmatpush1.msra.mxu0 0.0
        %558 = vmatprep.subr.mxu0 0.0
        %559 = vmatpush1.msra.mxu0 0.0
        %560 = vmatprep.subr.mxu0 0.0
        %561 = vmatpush1.msra.mxu0 0.0
        %562 = vmatprep.subr.mxu0 0.0
        %563 = vmatpush1.msra.mxu0 0.0
        %564 = vmatprep.subr.mxu0 0.0
        %565 = vmatpush1.msra.mxu0 0.0
        %566 = vmatprep.subr.mxu0 0.0
        %567 = vmatpush1.msra.mxu0 0.0
        %568 = vmatprep.subr.mxu0 0.0
        %569 = vmatpush1.msra.mxu0 0.0
        %570 = vmatprep.subr.mxu0 0.0
        %571 = vmatpush1.msra.mxu0 0.0
        %572 = vmatprep.subr.mxu0 0.0
        %573 = vmatpush1.msra.mxu0 0.0
        %574 = vmatprep.subr.mxu0 0.0
        %575 = vmatpush1.msra.mxu0 0.0
        %576 = vmatprep.subr.mxu0 0.0
        %577 = vmatpush1.msra.mxu0 0.0
        %578 = vmatprep.subr.mxu0 0.0
        %579 = vmatpush1.msra.mxu0 0.0
        %580 = vmatprep.subr.mxu0 0.0
        %581 = vmatpush1.msra.mxu0 0.0
        %582 = vmatprep.mubr.f32.mxu0 0.0
        %583 = vmatmul.mubr.f32.gmra.mrb[0].mxu0 %v436
        %v584 = vpop.f32.mrb[0].mxu0
        %v585 = vadd.f32 0.0, %v584
        %v586 = vpop.f32.mrb[0].mxu0
        %v587 = vadd.f32 0.0, %v586
        %588 = vmatprep.mubr.f32.mxu0 0.0
        %589 = vmatmul.mubr.f32.gmra.mrb[0].mxu0 %v439
        %v590 = vpop.f32.mrb[0].mxu0
        %v591 = vadd.f32 0.0, %v590
        %v592 = vpop.f32.mrb[0].mxu0
        %v593 = vadd.f32 0.0, %v592
        %594 = vdwg.mxu0
        %v596 = vsel %vm283, %v433, 0
        %v599 = vsel %vm283, %v434, 0
        %601 = vmatprep.subr.mxu0 %v410
        %602 = vmatpush1.msra.mxu0 %v408
        %603 = vmatprep.subr.mxu0 %v416
        %604 = vmatpush1.msra.mxu0 %v414
        %605 = vmatprep.subr.mxu0 0.0
        %606 = vmatpush1.msra.mxu0 0.0
        %607 = vmatprep.subr.mxu0 0.0
        %608 = vmatpush1.msra.mxu0 0.0
        %609 = vmatprep.subr.mxu0 0.0
        %610 = vmatpush1.msra.mxu0 0.0
        %611 = vmatprep.subr.mxu0 0.0
        %612 = vmatpush1.msra.mxu0 0.0
        %613 = vmatprep.subr.mxu0 0.0
        %614 = vmatpush1.msra.mxu0 0.0
        %615 = vmatprep.subr.mxu0 0.0
        %616 = vmatpush1.msra.mxu0 0.0
        %617 = vmatprep.subr.mxu0 0.0
        %618 = vmatpush1.msra.mxu0 0.0
        %619 = vmatprep.subr.mxu0 0.0
        %620 = vmatpush1.msra.mxu0 0.0
        %621 = vmatprep.subr.mxu0 0.0
        %622 = vmatpush1.msra.mxu0 0.0
        %623 = vmatprep.subr.mxu0 0.0
        %624 = vmatpush1.msra.mxu0 0.0
        %625 = vmatprep.subr.mxu0 0.0
        %626 = vmatpush1.msra.mxu0 0.0
        %627 = vmatprep.subr.mxu0 0.0
        %628 = vmatpush1.msra.mxu0 0.0
        %629 = vmatprep.subr.mxu0 0.0
        %630 = vmatpush1.msra.mxu0 0.0
        %631 = vmatprep.subr.mxu0 0.0
        %632 = vmatpush1.msra.mxu0 0.0
        %633 = vmatprep.subr.mxu0 0.0
        %634 = vmatpush1.msra.mxu0 0.0
        %635 = vmatprep.subr.mxu0 0.0
        %636 = vmatpush1.msra.mxu0 0.0
        %637 = vmatprep.subr.mxu0 0.0
        %638 = vmatpush1.msra.mxu0 0.0
        %639 = vmatprep.subr.mxu0 0.0
        %640 = vmatpush1.msra.mxu0 0.0
        %641 = vmatprep.subr.mxu0 0.0
        %642 = vmatpush1.msra.mxu0 0.0
        %643 = vmatprep.subr.mxu0 0.0
        %644 = vmatpush1.msra.mxu0 0.0
        %645 = vmatprep.subr.mxu0 0.0
        %646 = vmatpush1.msra.mxu0 0.0
        %647 = vmatprep.subr.mxu0 0.0
        %648 = vmatpush1.msra.mxu0 0.0
        %649 = vmatprep.subr.mxu0 0.0
        %650 = vmatpush1.msra.mxu0 0.0
        %651 = vmatprep.subr.mxu0 0.0
        %652 = vmatpush1.msra.mxu0 0.0
        %653 = vmatprep.subr.mxu0 0.0
        %654 = vmatpush1.msra.mxu0 0.0
        %655 = vmatprep.subr.mxu0 0.0
        %656 = vmatpush1.msra.mxu0 0.0
        %657 = vmatprep.subr.mxu0 0.0
        %658 = vmatpush1.msra.mxu0 0.0
        %659 = vmatprep.subr.mxu0 0.0
        %660 = vmatpush1.msra.mxu0 0.0
        %661 = vmatprep.subr.mxu0 0.0
        %662 = vmatpush1.msra.mxu0 0.0
        %663 = vmatprep.subr.mxu0 0.0
        %664 = vmatpush1.msra.mxu0 0.0
        %665 = vmatprep.mubr.f32.mxu0 0.0
        %666 = vmatmul.mubr.f32.gmra.mrb[0].mxu0 %v596
        %v667 = vpop.f32.mrb[0].mxu0
        %v668 = vadd.f32 0.0, %v667
        %v669 = vpop.f32.mrb[0].mxu0
        %v670 = vadd.f32 0.0, %v669
        %671 = vmatprep.mubr.f32.mxu0 0.0
        %672 = vmatmul.mubr.f32.gmra.mrb[0].mxu0 %v599
        %v673 = vpop.f32.mrb[0].mxu0
        %v674 = vadd.f32 0.0, %v673
        %v675 = vpop.f32.mrb[0].mxu0
        %v676 = vadd.f32 0.0, %v675
        %677 = vdwg.mxu0
        %678 = vmatprep.subr.mxu0 %v422
        %679 = vmatpush1.msra.mxu0 %v420
        %680 = vmatprep.subr.mxu0 %v428
        %681 = vmatpush1.msra.mxu0 %v426
        %682 = vmatprep.subr.mxu0 0.0
        %683 = vmatpush1.msra.mxu0 0.0
        %684 = vmatprep.subr.mxu0 0.0
        %685 = vmatpush1.msra.mxu0 0.0
        %686 = vmatprep.subr.mxu0 0.0
        %687 = vmatpush1.msra.mxu0 0.0
        %688 = vmatprep.subr.mxu0 0.0
        %689 = vmatpush1.msra.mxu0 0.0
        %690 = vmatprep.subr.mxu0 0.0
        %691 = vmatpush1.msra.mxu0 0.0
        %692 = vmatprep.subr.mxu0 0.0
        %693 = vmatpush1.msra.mxu0 0.0
        %694 = vmatprep.subr.mxu0 0.0
        %695 = vmatpush1.msra.mxu0 0.0
        %696 = vmatprep.subr.mxu0 0.0
        %697 = vmatpush1.msra.mxu0 0.0
        %698 = vmatprep.subr.mxu0 0.0
        %699 = vmatpush1.msra.mxu0 0.0
        %700 = vmatprep.subr.mxu0 0.0
        %701 = vmatpush1.msra.mxu0 0.0
        %702 = vmatprep.subr.mxu0 0.0
        %703 = vmatpush1.msra.mxu0 0.0
        %704 = vmatprep.subr.mxu0 0.0
        %705 = vmatpush1.msra.mxu0 0.0
        %706 = vmatprep.subr.mxu0 0.0
        %707 = vmatpush1.msra.mxu0 0.0
        %708 = vmatprep.subr.mxu0 0.0
        %709 = vmatpush1.msra.mxu0 0.0
        %710 = vmatprep.subr.mxu0 0.0
        %711 = vmatpush1.msra.mxu0 0.0
        %712 = vmatprep.subr.mxu0 0.0
        %713 = vmatpush1.msra.mxu0 0.0
        %714 = vmatprep.subr.mxu0 0.0
        %715 = vmatpush1.msra.mxu0 0.0
        %716 = vmatprep.subr.mxu0 0.0
        %717 = vmatpush1.msra.mxu0 0.0
        %718 = vmatprep.subr.mxu0 0.0
        %719 = vmatpush1.msra.mxu0 0.0
        %720 = vmatprep.subr.mxu0 0.0
        %721 = vmatpush1.msra.mxu0 0.0
        %722 = vmatprep.subr.mxu0 0.0
        %723 = vmatpush1.msra.mxu0 0.0
        %724 = vmatprep.subr.mxu0 0.0
        %725 = vmatpush1.msra.mxu0 0.0
        %726 = vmatprep.subr.mxu0 0.0
        %727 = vmatpush1.msra.mxu0 0.0
        %728 = vmatprep.subr.mxu0 0.0
        %729 = vmatpush1.msra.mxu0 0.0
        %730 = vmatprep.subr.mxu0 0.0
        %731 = vmatpush1.msra.mxu0 0.0
        %732 = vmatprep.subr.mxu0 0.0
        %733 = vmatpush1.msra.mxu0 0.0
        %734 = vmatprep.subr.mxu0 0.0
        %735 = vmatpush1.msra.mxu0 0.0
        %736 = vmatprep.subr.mxu0 0.0
        %737 = vmatpush1.msra.mxu0 0.0
        %738 = vmatprep.subr.mxu0 0.0
        %739 = vmatpush1.msra.mxu0 0.0
        %740 = vmatprep.subr.mxu0 0.0
        %741 = vmatpush1.msra.mxu0 0.0
        %742 = vmatprep.mubr.f32.mxu0 0.0
        %743 = vmatmul.mubr.f32.gmra.mrb[0].mxu0 %v596
        %v744 = vpop.f32.mrb[0].mxu0
        %v745 = vadd.f32 0.0, %v744
        %v746 = vpop.f32.mrb[0].mxu0
        %v747 = vadd.f32 0.0, %v746
        %748 = vmatprep.mubr.f32.mxu0 0.0
        %749 = vmatmul.mubr.f32.gmra.mrb[0].mxu0 %v599
        %v750 = vpop.f32.mrb[0].mxu0
        %v751 = vadd.f32 0.0, %v750
        %v752 = vpop.f32.mrb[0].mxu0
        %v753 = vadd.f32 0.0, %v752
        %754 = vdwg.mxu0
        %v755 = vadd.f32 %v508, %v670
        %v756 = vadd.f32 %v514, %v676
        %v757 = vsub.f32 %v510, %v668
        %v758 = vsub.f32 %v516, %v674
        %v759 = vadd.f32 %v585, %v747
        %v760 = vadd.f32 %v591, %v753
        %v761 = vsub.f32 %v587, %v745
        %v762 = vsub.f32 %v593, %v751
        %v763 = vmul.f32 %v755, %v755
        %v764 = vmul.f32 %v756, %v756
        %v765 = vmul.f32 %v757, %v757
        %v766 = vmul.f32 %v758, %v758
        %v767 = vadd.f32 %v763, %v765
        %v768 = vadd.f32 %v764, %v766
        %v769 = vrsqrt.pop %v767
        %v770 = vmul.f32 %v767, %v769
        %vm771 = vcmp.eq.f32.partialorder %v767, inf
        %v772 = vsel %vm771, %v767, %v770
        %vm773 = vcmp.eq.f32.partialorder %v767, 0.0
        %v774 = vand.u32 %v767, 2147483648
        %v775 = vsel %vm773, %v774, %v772
        %v776 = vrsqrt.pop %v768
        %v777 = vmul.f32 %v768, %v776
        %vm778 = vcmp.eq.f32.partialorder %v768, inf
        %v779 = vsel %vm778, %v768, %v777
        %vm780 = vcmp.eq.f32.partialorder %v768, 0.0
        %v781 = vand.u32 %v768, 2147483648
        %v782 = vsel %vm780, %v781, %v779
        %v783 = vmul.f32 %v775, 0.0625
        %v784 = vmul.f32 %v782, 0.0625
        %v785 = vmul.f32 %v759, %v759
        %v786 = vmul.f32 %v760, %v760
        %v787 = vmul.f32 %v761, %v761
        %v788 = vmul.f32 %v762, %v762
        %v789 = vadd.f32 %v785, %v787
        %v790 = vadd.f32 %v786, %v788
        %v791 = vrsqrt.pop %v789
        %v792 = vmul.f32 %v789, %v791
        %vm793 = vcmp.eq.f32.partialorder %v789, inf
        %v794 = vsel %vm793, %v789, %v792
        %vm795 = vcmp.eq.f32.partialorder %v789, 0.0
        %v796 = vand.u32 %v789, 2147483648
        %v797 = vsel %vm795, %v796, %v794
        %v798 = vrsqrt.pop %v790
        %v799 = vmul.f32 %v790, %v798
        %vm800 = vcmp.eq.f32.partialorder %v790, inf
        %v801 = vsel %vm800, %v790, %v799
        %vm802 = vcmp.eq.f32.partialorder %v790, 0.0
        %v803 = vand.u32 %v790, 2147483648
        %v804 = vsel %vm802, %v803, %v801
        %v805 = vmul.f32 %v797, 0.0625
        %v806 = vmul.f32 %v804, 0.0625
        %v807 = vsub.f32 %v783, %v805
        %v808 = vsub.f32 %v784, %v806
        %v809 = vmul.f32 %v807, %v807
        %v810 = vmul.f32 %v808, %v808
        %v811 = vadd.f32 %v809, %v810
        %812 = vadd.xlane.f32.xlu0 %v811
        %v813 = vpop.xlane.xlu0 %812
        %v814 = vrot.slane %v813, 4
        %v815 = vadd.f32 %v813, %v814
        %v816 = vrot.slane %v815, 2
        %v817 = vadd.f32 %v815, %v816
        %v818 = vrot.slane %v817, 1
        %v819 = vadd.f32 %v817, %v818
        %s820 = vtos %v819
        %s821 = sadd.f32 %s820, 0.0
        %v822 = vrcp.pop 1536.0
        %s823 = vtos %v822
        %s824 = smul.f32 %s304, %s823
        %v825 = vrcp.pop 288.0
        %s826 = vtos %v825
        %s827 = smul.f32 %s821, %s826
        %s828 = sadd.f32 %s824, %s827
        %v829 = vld [vmem:[#allocation4] sm:$0x1]
        %v830 = vstv %s828
        %v831 = vadd.f32 %v829, %v830
        %vm832 = vcmask 0
        %833 = vst.msk [vmem:[#allocation4] sm:$0x1] %vm832, %v831
        // Predicated region
        $region49: #{tpu_custom_call.1} parent=27 // pred_check
          %p834 = pneg %p222
        $region50: #{tpu_custom_call.1} parent=27 // pred_check_branch
          %836 = sbr.rel (%p834) target = $region52
        $region51: #{tpu_custom_call.1} parent=27 // pred_region
          %v837 = vld [vmem:[#allocation4] sm:$0x1]
          %838 = vst.msk [vmem:[%s221] sm:$0x1] %vm832, %v837
        $region52: #{tpu_custom_call.1} parent=27 // pred_fallthru
          _
        %p839 = scmp.lt.s32.totalorder %s25, 1
        %s840 = scalar_select %p839, %s25, 1
        %s841 = scalar_lea.vmem %s4, %s840
        // Predicated region
        $region53: #{tpu_custom_call.1} parent=27 // pred_check
          %p842 = pneg %p107
        $region54: #{tpu_custom_call.1} parent=27 // pred_check_branch
          %844 = sbr.rel (%p842) target = $region56
        $region55: #{tpu_custom_call.1} parent=27 // pred_region
          _
        $region56: #{tpu_custom_call.1} parent=27 // pred_fallthru
          _
      $region28: #{tpu_custom_call.1} parent=5 // pred_fallthru
        _
      %p845 = scmp.le.s32.totalorder 2, %s16
      // Predicated region
      $region57: #{tpu_custom_call.1} parent=5 // pred_check
        %p846 = pneg %p845
      $region58: #{tpu_custom_call.1} parent=5 // pred_check_branch
        %848 = sbr.rel (%p846) target = $region60
      $region59: #{tpu_custom_call.1} parent=5 // pred_region
        %s849 = ssub.s32 %s16, 2
        // Predicated region
        $region61: #{tpu_custom_call.1} parent=59 // pred_check
          %p850 = pneg %p113
        $region62: #{tpu_custom_call.1} parent=59 // pred_check_branch
          %852 = sbr.rel (%p850) target = $region64
        $region63: #{tpu_custom_call.1} parent=59 // pred_region
          %p853 = scmp.lt.s32.totalorder %s27, 1
          %s854 = scalar_select %p853, %s27, 1
          %s855 = scalar_lea.vmem %s4, %s854
        $region64: #{tpu_custom_call.1} parent=59 // pred_fallthru
          _
      $region60: #{tpu_custom_call.1} parent=5 // pred_fallthru
        _
    $region6: #{tpu_custom_call.1} parent=1 // loop_footer
      %s20 = sadd.s32 1, %s16
    $region7: #{tpu_custom_call.1} parent=1 // loop_footer_branch
      %15 = sbr.rel target = $region3
    $region8: #{tpu_custom_call.1} parent=1 // loop_exit
      _
    %856 = vsyncpa [#allocation7], 1
    %s857 = scalar_lea.sflag [#allocation7], 1
    %858 = vsyncpa %s857, 1
    %859 = vsyncpa [#allocation9], 1
    %s860 = scalar_lea.sflag [#allocation9], 1
    %861 = vsyncpa %s860, 1
  %862 = vsyncmov [#allocation5]
  %s863 = vpop.sfrf %862
  %p864 = scmp.eq.s32.totalorder %s863, 0
  %p865 = pneg %p864
  %867 = shalt.err (%p865)
  %s868 = scalar_lea.sflag [#allocation5], 1
  %869 = vsyncmov %s868
  %s870 = vpop.sfrf %869
  %p871 = scmp.eq.s32.totalorder %s870, 0
  %p872 = pneg %p871
  %874 = shalt.err (%p872)

</llo_original>
